<compile_context>
chip_gen: v7x
topology: tpu7x:2x2x1
jax: 0.10.0
libtpu: 0.0.40
codegen_flags: <defaults>
</compile_context>

<pallas_src>
import functools

import numpy as np
import jax
import jax.numpy as jnp
from jax.experimental import pallas as pl
from jax.experimental.pallas import tpu as pltpu


def _round_up(v, m):
    return ((v + m - 1) // m) * m


def _vmem_capacity_bytes():
    """Generation-aware VMEM size (128 MiB on v5e/v6e, 64 MiB on v7x)."""
    try:
        info = pltpu.get_tpu_info()
        cap = getattr(info, "vmem_capacity_bytes", None)
        if cap:
            return int(cap)
    except Exception:
        pass
    return 64 * 1024 * 1024  # conservative (v7x-sized) fallback


# ---------------------------------------------------------------------------
# Kernel 1: one-shot mixture build, tiled over the output-feature axis.
#   w_mix[i, o] = w_t[i, o] * sum_k alpha_k * [i < d_k] * [o < 3*d_k]
#   b_mix[o]    = b[o]      * sum_k alpha_k * [o < 3*d_k]
# embed_dim_list is static -> masks use immediates; only alpha is traced
# (small f32 vector kept whole in SMEM).  The mixed weight is emitted in the
# matmul compute dtype (bf16 by default) so the matmul DMAs half the bytes.
# ---------------------------------------------------------------------------
def _mix_weight_kernel(embed_dims, tile_cols, alpha_ref, w_ref, b_ref,
                       wmix_ref, bmix_ref):
    e_rows, tc = w_ref.shape
    col0 = pl.program_id(0) * tile_cols
    row = jax.lax.broadcasted_iota(jnp.int32, (e_rows, 1), 0)   # input feature
    col = col0 + jax.lax.broadcasted_iota(jnp.int32, (1, tc), 1)  # output feat
    w_scale = jnp.zeros((e_rows, tc), jnp.float32)
    b_scale = jnp.zeros((1, tc), jnp.float32)
    for k, d in enumerate(embed_dims):                           # static unroll
        a = alpha_ref[k]                                         # f32 SMEM scalar
        rmask = (row < d).astype(jnp.float32)                    # (E, 1)
        cmask = (col < 3 * d).astype(jnp.float32)                # (1, tc)
        w_scale = w_scale + a * (rmask * cmask)
        b_scale = b_scale + a * cmask
    wmix_ref[...] = (w_ref[...] * w_scale).astype(wmix_ref.dtype)
    bmix_ref[...] = b_ref[...] * b_scale


def _build_mixture(alpha, w_t, b_row, embed_dims, compute_dtype):
    """w_t: (E, Dop) f32 (pre-transposed, Dop 128-aligned); b_row: (1, Dop)."""
    E, Dop = w_t.shape
    cap = _vmem_capacity_bytes()
    budget = cap * 3 // 4
    itm_mix = np.dtype(compute_dtype).itemsize

    tile = min(Dop, 512)

    def est(t):
        # double-buffered in/out column blocks + f32 scale temporary
        return 2 * E * t * (4 + itm_mix) + 4 * t * 8 + E * t * 4

    while tile > 128 and est(tile) > budget:
        tile = max(128, _round_up(tile // 2, 128))

    grid = (pl.cdiv(Dop, tile),)
    kernel = functools.partial(_mix_weight_kernel,
                               tuple(int(d) for d in embed_dims), tile)
    vmem_limit = int(min(max(est(tile) * 5 // 4 + (4 << 20), 32 << 20),
                         cap - (12 << 20)))
    return pl.pallas_call(
        kernel,
        out_shape=(jax.ShapeDtypeStruct((E, Dop), compute_dtype),
                   jax.ShapeDtypeStruct((1, Dop), jnp.float32)),
        grid=grid,
        in_specs=[
            pl.BlockSpec(memory_space=pltpu.MemorySpace.SMEM),   # alpha (whole)
            pl.BlockSpec((E, tile), lambda j: (0, j)),           # w_t column blk
            pl.BlockSpec((1, tile), lambda j: (0, j)),           # bias column blk
        ],
        out_specs=(pl.BlockSpec((E, tile), lambda j: (0, j)),
                   pl.BlockSpec((1, tile), lambda j: (0, j))),
        compiler_params=pltpu.CompilerParams(
            dimension_semantics=("parallel",),
            vmem_limit_bytes=vmem_limit),
    )(alpha, w_t, b_row)


# ---------------------------------------------------------------------------
# Kernel 2: (dout, rows) gridded linear.  out_tile = x_tile @ W_blk + b_blk
#   x streams in its native dtype; W is pre-transposed (Din, Dout) so there is
#   no in-kernel transpose, the MXU accumulates in f32 and the store is in
#   out_dtype (bf16 when the caller is bf16 -> halves the dominant HBM stream).
# ---------------------------------------------------------------------------
def _linear_kernel(x_ref, w_ref, b_ref, o_ref):
    w = w_ref[...]
    acc = jnp.dot(x_ref[...].astype(w.dtype), w,
                  preferred_element_type=jnp.float32)
    o_ref[...] = (acc + b_ref[...]).astype(o_ref.dtype)


def _tiled_linear(x2, w, b_row, *, out_dtype, tile_n=512):
    """out = x2 @ w + b_row.   x2: (N, Din); w: (Din, Dout); b_row: (1, Dout)."""
    N, Din = x2.shape
    Dw, Dout = w.shape
    assert Dw == Din and b_row.shape == (1, Dout)

    cap = _vmem_capacity_bytes()
    budget = cap * 3 // 4
    itm_x = np.dtype(x2.dtype).itemsize
    itm_w = np.dtype(w.dtype).itemsize
    itm_o = np.dtype(out_dtype).itemsize

    tile_n = max(8, min(_round_up(tile_n, 8), _round_up(N, 8)))
    tile_dout = _round_up(Dout, 128)

    def est(tn, td):
        return (2 * tn * Din * itm_x        # streamed x tiles (double-buffered)
                + 2 * Din * td * itm_w      # weight block (conservatively x2)
                + 2 * td * 4                # bias block
                + 2 * tn * td * itm_o)      # output tiles (double-buffered)

    # Large weights: shrink the Dout tile first (keeps the MXU M dim large),
    # then the row tile down to 128, then (last resort) the row tile further.
    while tile_dout > 128 and est(tile_n, tile_dout) > budget:
        tile_dout = max(128, _round_up(tile_dout // 2, 128))
    while tile_n > 128 and est(tile_n, tile_dout) > budget:
        tile_n = max(128, _round_up(tile_n // 2, 8))
    while tile_n > 8 and est(tile_n, tile_dout) > budget:
        tile_n = max(8, (tile_n // 2) // 8 * 8)

    grid = (pl.cdiv(Dout, tile_dout), pl.cdiv(N, tile_n))   # (dout blocks, row blocks)

    cost = pl.CostEstimate(
        flops=2 * N * Din * Dout,
        transcendentals=0,
        bytes_accessed=(N * Din * itm_x + Din * Dout * itm_w
                        + Dout * 4 + N * Dout * itm_o))
    vmem_limit = int(min(max(est(tile_n, tile_dout) * 5 // 4 + (4 << 20),
                             32 << 20),
                         cap - (12 << 20)))

    return pl.pallas_call(
        _linear_kernel,
        out_shape=jax.ShapeDtypeStruct((N, Dout), out_dtype),
        grid=grid,
        in_specs=[
            pl.BlockSpec((tile_n, Din), lambda j, i: (i, 0)),     # x (streamed)
            pl.BlockSpec((Din, tile_dout), lambda j, i: (0, j)),  # weight (quasi-resident)
            pl.BlockSpec((1, tile_dout), lambda j, i: (0, j)),    # bias
        ],
        out_specs=pl.BlockSpec((tile_n, tile_dout), lambda j, i: (i, j)),
        compiler_params=pltpu.CompilerParams(
            dimension_semantics=("parallel", "parallel"),
            vmem_limit_bytes=vmem_limit),
        cost_estimate=cost,
    )(x2, w, b_row)


# ---------------------------------------------------------------------------
# Public wrapper: equivalent of MixedEmbeddingAttention.forward.
# ---------------------------------------------------------------------------
def mixed_embedding_attention(x, arch_weights, embed_dim_list, linear_weight,
                              linear_bias, use_argmax=False,
                              compute_dtype=jnp.bfloat16, out_dtype=None,
                              tile_n=512):
    """x: (B, T, E); linear_weight: (3E, E) PyTorch layout; linear_bias: (3E,)."""
    x = jnp.asarray(x)
    B, T, E = x.shape
    E3 = 3 * E
    N = B * T
    if out_dtype is None:
        out_dtype = x.dtype                      # bf16 callers get bf16 writeback
    x2 = x.reshape(N, E)                         # native dtype, no extra HBM pass
    aw = jnp.asarray(arch_weights, jnp.float32)
    w_t = jnp.asarray(linear_weight, jnp.float32).T   # (E, 3E), pre-transposed
    b = jnp.asarray(linear_bias, jnp.float32)

    if use_argmax:
        # The chosen embed dim defines the *output shape*, so it must be a
        # Python value; resolve the (tiny) argmax on the host.
        # TODO(synk): data-dependent output shape cannot be made jit-traceable.
        k = int(np.argmax(np.asarray(arch_weights)))
        d = int(embed_dim_list[k])
        d3 = 3 * d
        dop = _round_up(d3, 128)                 # lane-dense output stores
        w_sel = jnp.pad((w_t[:d, :d3] * aw[k]).astype(compute_dtype),
                        ((0, 0), (0, dop - d3)))
        b_sel = jnp.pad(b[:d3] * aw[k], (0, dop - d3)).reshape(1, dop)
        out2 = _tiled_linear(x2[:, :d], w_sel, b_sel,
                             out_dtype=out_dtype, tile_n=tile_n)
        return out2[:, :d3].reshape(B, T, d3)

    # Mixture path: pad only the *weight/bias* output dim to a lane multiple
    # (cheap, done once), build the mixed weight/bias in the one-shot kernel,
    # then run the gridded matmul.
    dop = _round_up(E3, 128)
    if dop != E3:
        w_t = jnp.pad(w_t, ((0, 0), (0, dop - E3)))
        b = jnp.pad(b, (0, dop - E3))
    b_row = b.reshape(1, dop)
    w_mix, b_mix = _build_mixture(aw, w_t, b_row, embed_dim_list, compute_dtype)
    out2 = _tiled_linear(x2, w_mix, b_mix, out_dtype=out_dtype, tile_n=tile_n)
    return out2[:, :E3].reshape(B, T, E3)


# ---------------------------------------------------------------------------
# Plain-JAX references for testing.
# ---------------------------------------------------------------------------
def _reference_mixture(x, arch_weights, embed_dim_list, W, b):
    E = x.shape[-1]
    E3 = 3 * E
    Wm = jnp.zeros((E3, E), jnp.float32)
    bm = jnp.zeros((E3,), jnp.float32)
    for i, d in enumerate(embed_dim_list):
        Wm = Wm.at[:3 * d, :d].add(arch_weights[i] * W[:3 * d, :d])
        bm = bm.at[:3 * d].add(arch_weights[i] * b[:3 * d])
    return jnp.einsum("bte,oe->bto", x.astype(jnp.float32), Wm,
                      precision=jax.lax.Precision.HIGHEST) + bm


def _reference_argmax(x, arch_weights, embed_dim_list, W, b):
    k = int(np.argmax(np.asarray(arch_weights)))
    d = int(embed_dim_list[k])
    Ws = arch_weights[k] * W[:3 * d, :d]
    bs = arch_weights[k] * b[:3 * d]
    return jnp.einsum("bte,oe->bto", x[..., :d].astype(jnp.float32), Ws,
                      precision=jax.lax.Precision.HIGHEST) + bs


if __name__ == "__main__":
    # Small deterministic setup consistent with the module:
    #   super-net embed dim E=32, candidate dims [8, 16, 32], seq=8, batch=2.
    B, T, E = 2, 8, 32
    embed_dim_list = [8, 16, 32]

    key = jax.random.PRNGKey(0)
    kx, kw, kb, ka = jax.random.split(key, 4)
    x = jax.random.normal(kx, (B, T, E), dtype=jnp.float32)
    linear_weight = jax.random.normal(kw, (3 * E, E), dtype=jnp.float32) * 0.02
    linear_bias = jax.random.normal(kb, (3 * E,), dtype=jnp.float32) * 0.02
    arch_weights = jax.nn.softmax(
        jax.random.normal(ka, (len(embed_dim_list),), dtype=jnp.float32))

    ref = _reference_mixture(x, arch_weights, embed_dim_list, linear_weight,
                             linear_bias)

    # 1) f32 compute path (checks mixture/masking logic; default MXU f32
    #    precision -> modest tolerance).
    out_f32 = mixed_embedding_attention(x, arch_weights, embed_dim_list,
                                        linear_weight, linear_bias,
                                        use_argmax=False,
                                        compute_dtype=jnp.float32)
    out_f32 = jax.block_until_ready(out_f32)
    assert out_f32.shape == (B, T, 3 * E), out_f32.shape
    assert out_f32.dtype == x.dtype, out_f32.dtype
    assert jnp.allclose(out_f32.astype(jnp.float32), ref, atol=5e-3, rtol=5e-3), (
        "f32 mixture mismatch", float(jnp.max(jnp.abs(out_f32 - ref))))

    # 2) default perf config: bf16 weights on the MXU, f32 x in, f32 out.
    out_bf = mixed_embedding_attention(x, arch_weights, embed_dim_list,
                                       linear_weight, linear_bias,
                                       use_argmax=False)
    out_bf = jax.block_until_ready(out_bf)
    assert out_bf.shape == (B, T, 3 * E), out_bf.shape
    assert jnp.allclose(out_bf.astype(jnp.float32), ref, atol=3e-2, rtol=3e-2), (
        "bf16-weight mixture mismatch", float(jnp.max(jnp.abs(out_bf - ref))))

    # 3) fully-bf16 streaming path (native bf16 x in, bf16 out) - the
    #    HBM-optimal configuration the perf review asks for.
    x_bf = x.astype(jnp.bfloat16)
    out_bb = mixed_embedding_attention(x_bf, arch_weights, embed_dim_list,
                                       linear_weight, linear_bias,
                                       use_argmax=False)
    out_bb = jax.block_until_ready(out_bb)
    assert out_bb.shape == (B, T, 3 * E), out_bb.shape
    assert out_bb.dtype == jnp.bfloat16, out_bb.dtype
    assert jnp.allclose(out_bb.astype(jnp.float32), ref, atol=5e-2, rtol=5e-2), (
        "bf16 io mixture mismatch",
        float(jnp.max(jnp.abs(out_bb.astype(jnp.float32) - ref))))

    # 4) argmax path (un-padded small matmul, host-resolved choice).
    ref_am = _reference_argmax(x, arch_weights, embed_dim_list, linear_weight,
                               linear_bias)
    out_am = mixed_embedding_attention(x, arch_weights, embed_dim_list,
                                       linear_weight, linear_bias,
                                       use_argmax=True,
                                       compute_dtype=jnp.float32)
    out_am = jax.block_until_ready(out_am)
    assert out_am.shape == ref_am.shape, (out_am.shape, ref_am.shape)
    assert jnp.allclose(out_am.astype(jnp.float32), ref_am,
                        atol=5e-3, rtol=5e-3), (
        "argmax path mismatch", float(jnp.max(jnp.abs(out_am - ref_am))))

    print("KERNEL_OK")
</pallas_src>

<mosaic_0001>
module attributes {stable_mosaic.version = 11 : i64} {
  func.func @_mix_weight_kernel(%arg0: i32, %arg1: memref<3xf32, #tpu.memory_space<smem>>, %arg2: memref<32x128xf32, #tpu.memory_space<vmem>>, %arg3: memref<1x128xf32, #tpu.memory_space<vmem>>, %arg4: memref<32x128xf32, #tpu.memory_space<vmem>>, %arg5: memref<1x128xf32, #tpu.memory_space<vmem>>) attributes {dimension_semantics = [#tpu.dimension_semantics<parallel>], iteration_bounds = array<i64: 1>, scalar_prefetch = 0 : i64, scratch_operands = 0 : i64, tpu.core_type = #tpu.core_type<tc>, window_params = [{transform_indices = @transform_0, window_bounds = array<i64: 3>}, {transform_indices = @transform_1, window_bounds = array<i64: 32, 128>}, {transform_indices = @transform_2, window_bounds = array<i64: 1, 128>}, {transform_indices = @transform_3, window_bounds = array<i64: 32, 128>}, {transform_indices = @transform_4, window_bounds = array<i64: 1, 128>}]} {
    %c128_i32 = arith.constant 128 : i32
    %0 = arith.muli %arg0, %c128_i32 : i32
    %1 = tpu.iota {dimensions = array<i32: 0>} : vector<32x1xi32>
    %2 = tpu.iota {dimensions = array<i32: 1>} : vector<1x128xi32>
    %3 = vector.broadcast %0 : i32 to vector<1x128xi32>
    %4 = arith.addi %3, %2 : vector<1x128xi32>
    %cst = arith.constant 0.000000e+00 : f32
    %5 = vector.broadcast %cst : f32 to vector<32x128xf32>
    %cst_0 = arith.constant 0.000000e+00 : f32
    %6 = vector.broadcast %cst_0 : f32 to vector<1x128xf32>
    %c0 = arith.constant 0 : index
    %7 = memref.load %arg1[%c0] : memref<3xf32, #tpu.memory_space<smem>>
    %c8_i32 = arith.constant 8 : i32
    %8 = vector.broadcast %c8_i32 : i32 to vector<32x1xi32>
    %9 = arith.cmpi slt, %1, %8 : vector<32x1xi32>
    %10 = arith.extui %9 : vector<32x1xi1> to vector<32x1xi32>
    %11 = arith.sitofp %10 : vector<32x1xi32> to vector<32x1xf32>
    %c24_i32 = arith.constant 24 : i32
    %12 = vector.broadcast %c24_i32 : i32 to vector<1x128xi32>
    %13 = arith.cmpi slt, %4, %12 : vector<1x128xi32>
    %14 = arith.extui %13 : vector<1x128xi1> to vector<1x128xi32>
    %15 = arith.sitofp %14 : vector<1x128xi32> to vector<1x128xf32>
    %16 = vector.broadcast %11 : vector<32x1xf32> to vector<32x128xf32>
    %17 = vector.broadcast %15 : vector<1x128xf32> to vector<32x128xf32>
    %18 = arith.mulf %16, %17 : vector<32x128xf32>
    %19 = vector.broadcast %7 : f32 to vector<32x128xf32>
    %20 = arith.mulf %19, %18 : vector<32x128xf32>
    %21 = arith.addf %5, %20 : vector<32x128xf32>
    %22 = vector.broadcast %7 : f32 to vector<1x128xf32>
    %23 = arith.mulf %22, %15 : vector<1x128xf32>
    %24 = arith.addf %6, %23 : vector<1x128xf32>
    %c1 = arith.constant 1 : index
    %25 = memref.load %arg1[%c1] : memref<3xf32, #tpu.memory_space<smem>>
    %c16_i32 = arith.constant 16 : i32
    %26 = vector.broadcast %c16_i32 : i32 to vector<32x1xi32>
    %27 = arith.cmpi slt, %1, %26 : vector<32x1xi32>
    %28 = arith.extui %27 : vector<32x1xi1> to vector<32x1xi32>
    %29 = arith.sitofp %28 : vector<32x1xi32> to vector<32x1xf32>
    %c48_i32 = arith.constant 48 : i32
    %30 = vector.broadcast %c48_i32 : i32 to vector<1x128xi32>
    %31 = arith.cmpi slt, %4, %30 : vector<1x128xi32>
    %32 = arith.extui %31 : vector<1x128xi1> to vector<1x128xi32>
    %33 = arith.sitofp %32 : vector<1x128xi32> to vector<1x128xf32>
    %34 = vector.broadcast %29 : vector<32x1xf32> to vector<32x128xf32>
    %35 = vector.broadcast %33 : vector<1x128xf32> to vector<32x128xf32>
    %36 = arith.mulf %34, %35 : vector<32x128xf32>
    %37 = vector.broadcast %25 : f32 to vector<32x128xf32>
    %38 = arith.mulf %37, %36 : vector<32x128xf32>
    %39 = arith.addf %21, %38 : vector<32x128xf32>
    %40 = vector.broadcast %25 : f32 to vector<1x128xf32>
    %41 = arith.mulf %40, %33 : vector<1x128xf32>
    %42 = arith.addf %24, %41 : vector<1x128xf32>
    %c2 = arith.constant 2 : index
    %43 = memref.load %arg1[%c2] : memref<3xf32, #tpu.memory_space<smem>>
    %c32_i32 = arith.constant 32 : i32
    %44 = vector.broadcast %c32_i32 : i32 to vector<32x1xi32>
    %45 = arith.cmpi slt, %1, %44 : vector<32x1xi32>
    %46 = arith.extui %45 : vector<32x1xi1> to vector<32x1xi32>
    %47 = arith.sitofp %46 : vector<32x1xi32> to vector<32x1xf32>
    %c96_i32 = arith.constant 96 : i32
    %48 = vector.broadcast %c96_i32 : i32 to vector<1x128xi32>
    %49 = arith.cmpi slt, %4, %48 : vector<1x128xi32>
    %50 = arith.extui %49 : vector<1x128xi1> to vector<1x128xi32>
    %51 = arith.sitofp %50 : vector<1x128xi32> to vector<1x128xf32>
    %52 = vector.broadcast %47 : vector<32x1xf32> to vector<32x128xf32>
    %53 = vector.broadcast %51 : vector<1x128xf32> to vector<32x128xf32>
    %54 = arith.mulf %52, %53 : vector<32x128xf32>
    %55 = vector.broadcast %43 : f32 to vector<32x128xf32>
    %56 = arith.mulf %55, %54 : vector<32x128xf32>
    %57 = arith.addf %39, %56 : vector<32x128xf32>
    %58 = vector.broadcast %43 : f32 to vector<1x128xf32>
    %59 = arith.mulf %58, %51 : vector<1x128xf32>
    %60 = arith.addf %42, %59 : vector<1x128xf32>
    %c0_1 = arith.constant 0 : index
    %c0_2 = arith.constant 0 : index
    %61 = vector.load %arg2[%c0_1, %c0_2] : memref<32x128xf32, #tpu.memory_space<vmem>>, vector<32x128xf32>
    %62 = arith.mulf %61, %57 : vector<32x128xf32>
    %c0_3 = arith.constant 0 : index
    %c0_4 = arith.constant 0 : index
    %63 = vector.load %arg4[%c0_3, %c0_4] : memref<32x128xf32, #tpu.memory_space<vmem>>, vector<32x128xf32>
    tpu.vector_store %arg4[%c0_3, %c0_4], %62 {strides = array<i32>} : memref<32x128xf32, #tpu.memory_space<vmem>>, vector<32x128xf32>,
    %c0_5 = arith.constant 0 : index
    %c0_6 = arith.constant 0 : index
    %64 = vector.load %arg3[%c0_5, %c0_6] : memref<1x128xf32, #tpu.memory_space<vmem>>, vector<1x128xf32>
    %65 = arith.mulf %64, %60 : vector<1x128xf32>
    %c0_7 = arith.constant 0 : index
    %c0_8 = arith.constant 0 : index
    %66 = vector.load %arg5[%c0_7, %c0_8] : memref<1x128xf32, #tpu.memory_space<vmem>>, vector<1x128xf32>
    tpu.vector_store %arg5[%c0_7, %c0_8], %65 {strides = array<i32>} : memref<1x128xf32, #tpu.memory_space<vmem>>, vector<1x128xf32>,
    return
  }
  func.func @transform_0(%arg0: i32) -> i32 {
    %c0_i32 = arith.constant 0 : i32
    %c0_i32_0 = arith.constant 0 : i32
    return %c0_i32 : i32
  }
  func.func @transform_1(%arg0: i32) -> (i32, i32) {
    %c0_i32 = arith.constant 0 : i32
    %c0_i32_0 = arith.constant 0 : i32
    return %c0_i32, %arg0 : i32, i32
  }
  func.func @transform_2(%arg0: i32) -> (i32, i32) {
    %c0_i32 = arith.constant 0 : i32
    %c0_i32_0 = arith.constant 0 : i32
    return %c0_i32, %arg0 : i32, i32
  }
  func.func @transform_3(%arg0: i32) -> (i32, i32) {
    %c0_i32 = arith.constant 0 : i32
    %c0_i32_0 = arith.constant 0 : i32
    return %c0_i32, %arg0 : i32, i32
  }
  func.func @transform_4(%arg0: i32) -> (i32, i32) {
    %c0_i32 = arith.constant 0 : i32
    %c0_i32_0 = arith.constant 0 : i32
    return %c0_i32, %arg0 : i32, i32
  }
}

</mosaic_0001>

<llo_original>
// kernel: tpu_custom_call.1
$region0: #{tpu_custom_call.1}
  #allocation0 [shape = 'u32[]', space=smem, size = 0x4, offset = 0x4, fixed_abs, tag = 'smem constant byte address 0x4 - core index']
  #allocation1 [shape = 'u32[144,128]{1,0:T(1,128)}', space=vmem, size = 0x12000, scoped, tag = 'internal scratch']
  %s0 = inlined_call_operand.hbm [shape: f32[3], index: 0, kind: input, shape index: {}]
  %s1 = inlined_call_operand.hbm [shape: f32[32,128], index: 1, kind: input, shape index: {}]
  %s2 = inlined_call_operand.vmem [shape: f32[1,128], index: 2, kind: input, shape index: {}]
  %s3 = inlined_call_operand.hbm [shape: f32[32,128], index: 3, kind: output, shape index: {0}]
  %s4 = inlined_call_operand.hbm [shape: f32[1,128], index: 4, kind: output, shape index: {1}]
  %5 = xla_tuple %s3, %s4
  %s6 = sld [smem:[#allocation0]]
  $region38: #{tpu_custom_call.1} parent=0
    _
  %s8 = ssub.s32 1, %s6
  %s9 = scalar_select 0, %s8, %s6
  $region1: #{tpu_custom_call.1} parent=0
    #allocation2 [shape = 'u8[512]{0}', space=smem, size = 0x200, scoped, tag = 'input window, operand 0, single buffered']
    #allocation3 [shape = 's32[1]{0}', space=sflag, size = 0x4, scoped, tag = 'scoped memory for tpu_custom_call.1']
    #allocation4 [shape = 's32[1]{0}', space=sflag, size = 0x4, scoped, tag = 'scoped memory for tpu_custom_call.1']
    #allocation5 [shape = 's32[1]{0}', space=sflag, size = 0x4, scoped, tag = 'scoped memory for tpu_custom_call.1']
    #allocation6 [shape = 'u8[16384]{0}', space=vmem, size = 0x4000, scoped, tag = 'input window, operand 1, single buffered']
    #allocation7 [shape = 'u8[16384]{0}', space=vmem, size = 0x4000, scoped, tag = 'output window, operand 0, single buffered']
    #allocation8 [shape = 'u8[512]{0}', space=vmem, size = 0x400, scoped, tag = 'output window, operand 1, single buffered']
    #allocation9 [shape = 's32[1]{0}', space=sflag, size = 0x4, scoped, tag = 'scoped memory for tpu_custom_call.1']
    %10 = vsyncpa [#allocation5], 0
    %11 = vsyncpa [#allocation3], 0
    %12 = vsyncpa [#allocation4], 0
    %13 = vsyncpa [#allocation9], 0
    // Predicated region
    $region2: #{tpu_custom_call.1} parent=1 // pred_check
      _
    $region3: #{tpu_custom_call.1} parent=1 // pred_check_branch
      %15 = sbr.rel (0) target = $region5
    $region4: #{tpu_custom_call.1} parent=1 // pred_region
      %s17 = ssub.s32 16, 16
      %18 = vsyncadd [#allocation5], %s17
      %21 = dma.hbm_to_smem %s0, 16, [#allocation2], [#allocation5]
    $region5: #{tpu_custom_call.1} parent=1 // pred_fallthru
      _
    // Predicated region
    $region6: #{tpu_custom_call.1} parent=1 // pred_check
      _
    $region7: #{tpu_custom_call.1} parent=1 // pred_check_branch
      %23 = sbr.rel (0) target = $region9
    $region8: #{tpu_custom_call.1} parent=1 // pred_region
      %s25 = ssub.s32 512, 512
      %26 = vsyncadd [#allocation3], %s25
      %s27 = sshll.u32 [#allocation6], 4
      %s28 = int_to_ptr.vmem [resolvable:$true] %s27
      %33 = dma.hbm_to_vmem [thread:$0]  %s1, 512, %s28, [#allocation3], 128, 128, 8
    $region9: #{tpu_custom_call.1} parent=1 // pred_fallthru
      _
    // Predicated region
    $region10: #{tpu_custom_call.1} parent=1 // pred_check
      _
    $region11: #{tpu_custom_call.1} parent=1 // pred_check_branch
      %35 = sbr.rel (0) target = $region13
    $region12: #{tpu_custom_call.1} parent=1 // pred_region
      _
    $region13: #{tpu_custom_call.1} parent=1 // pred_fallthru
      _
    // Predicated region
    $region14: #{tpu_custom_call.1} parent=1 // pred_check
      _
    $region15: #{tpu_custom_call.1} parent=1 // pred_check_branch
      %37 = sbr.rel (0) target = $region17
    $region16: #{tpu_custom_call.1} parent=1 // pred_region
      %38 = dma.done [#allocation5], 16
    $region17: #{tpu_custom_call.1} parent=1 // pred_fallthru
      _
    // Predicated region
    $region18: #{tpu_custom_call.1} parent=1 // pred_check
      _
    $region19: #{tpu_custom_call.1} parent=1 // pred_check_branch
      %40 = sbr.rel (0) target = $region21
    $region20: #{tpu_custom_call.1} parent=1 // pred_region
      %41 = dma.done [#allocation3], 512
    $region21: #{tpu_custom_call.1} parent=1 // pred_fallthru
      _
    %42 = sfence
    %s43 = smul.u32 0, 128
    %v44 = vlaneseq
    %v45 = vshrl.u32 %v44, 7
    %v46 = vadd.s32 %v45, 8
    %v47 = vadd.s32 %v45, 16
    %v48 = vadd.s32 %v45, 24
    %v49 = vlaneseq
    %v50 = vand.u32 %v49, 127
    %v51 = vstv %s43
    %v52 = vadd.s32 %v51, %v50
    %s53 = sld [smem:[#allocation2]]
    %vm54 = vcmp.lt.s32.totalorder %v45, 8
    %vm55 = vcmp.lt.s32.totalorder %v46, 8
    %vm56 = vcmp.lt.s32.totalorder %v47, 8
    %vm57 = vcmp.lt.s32.totalorder %v48, 8
    %v58 = vsel %vm54, 1, 0
    %v59 = vsel %vm55, 1, 0
    %v60 = vsel %vm56, 1, 0
    %v61 = vsel %vm57, 1, 0
    %v62 = vcvt.s32.f32 %v58
    %v63 = vcvt.s32.f32 %v59
    %v64 = vcvt.s32.f32 %v60
    %v65 = vcvt.s32.f32 %v61
    %vm66 = vcmp.lt.s32.totalorder %v52, 24
    %v67 = vsel %vm66, 1, 0
    %v68 = vcvt.s32.f32 %v67
    %v69 = vmul.f32 %v62, %v68
    %v70 = vmul.f32 %v63, %v68
    %v71 = vmul.f32 %v64, %v68
    %v72 = vmul.f32 %v65, %v68
    %v73 = vstv %s53
    %v74 = vmul.f32 %v73, %v69
    %v75 = vmul.f32 %v73, %v70
    %v76 = vmul.f32 %v73, %v71
    %v77 = vmul.f32 %v73, %v72
    %v78 = vadd.f32 %v74, 0.0
    %v79 = vadd.f32 %v75, 0.0
    %v80 = vadd.f32 %v76, 0.0
    %v81 = vadd.f32 %v77, 0.0
    %v82 = vmul.f32 %v73, %v68
    %v83 = vadd.f32 %v82, 0.0
    %s84 = sld [smem:[#allocation2 + $0x1]]
    %vm85 = vcmp.lt.s32.totalorder %v45, 16
    %vm86 = vcmp.lt.s32.totalorder %v46, 16
    %vm87 = vcmp.lt.s32.totalorder %v47, 16
    %vm88 = vcmp.lt.s32.totalorder %v48, 16
    %v89 = vsel %vm85, 1, 0
    %v90 = vsel %vm86, 1, 0
    %v91 = vsel %vm87, 1, 0
    %v92 = vsel %vm88, 1, 0
    %v93 = vcvt.s32.f32 %v89
    %v94 = vcvt.s32.f32 %v90
    %v95 = vcvt.s32.f32 %v91
    %v96 = vcvt.s32.f32 %v92
    %vm97 = vcmp.lt.s32.totalorder %v52, 48
    %v98 = vsel %vm97, 1, 0
    %v99 = vcvt.s32.f32 %v98
    %v100 = vmul.f32 %v93, %v99
    %v101 = vmul.f32 %v94, %v99
    %v102 = vmul.f32 %v95, %v99
    %v103 = vmul.f32 %v96, %v99
    %v104 = vstv %s84
    %v105 = vmul.f32 %v104, %v100
    %v106 = vmul.f32 %v104, %v101
    %v107 = vmul.f32 %v104, %v102
    %v108 = vmul.f32 %v104, %v103
    %v109 = vadd.f32 %v78, %v105
    %v110 = vadd.f32 %v79, %v106
    %v111 = vadd.f32 %v80, %v107
    %v112 = vadd.f32 %v81, %v108
    %v113 = vmul.f32 %v104, %v99
    %v114 = vadd.f32 %v83, %v113
    %s115 = sld [smem:[#allocation2 + $0x2]]
    %vm116 = vcmp.lt.s32.totalorder %v45, 32
    %vm117 = vcmp.lt.s32.totalorder %v46, 32
    %vm118 = vcmp.lt.s32.totalorder %v47, 32
    %vm119 = vcmp.lt.s32.totalorder %v48, 32
    %v120 = vsel %vm116, 1, 0
    %v121 = vsel %vm117, 1, 0
    %v122 = vsel %vm118, 1, 0
    %v123 = vsel %vm119, 1, 0
    %v124 = vcvt.s32.f32 %v120
    %v125 = vcvt.s32.f32 %v121
    %v126 = vcvt.s32.f32 %v122
    %v127 = vcvt.s32.f32 %v123
    %vm128 = vcmp.lt.s32.totalorder %v52, 96
    %v129 = vsel %vm128, 1, 0
    %v130 = vcvt.s32.f32 %v129
    %v131 = vmul.f32 %v124, %v130
    %v132 = vmul.f32 %v125, %v130
    %v133 = vmul.f32 %v126, %v130
    %v134 = vmul.f32 %v127, %v130
    %v135 = vstv %s115
    %v136 = vmul.f32 %v135, %v131
    %v137 = vmul.f32 %v135, %v132
    %v138 = vmul.f32 %v135, %v133
    %v139 = vmul.f32 %v135, %v134
    %v140 = vadd.f32 %v109, %v136
    %v141 = vadd.f32 %v110, %v137
    %v142 = vadd.f32 %v111, %v138
    %v143 = vadd.f32 %v112, %v139
    %v144 = vmul.f32 %v135, %v130
    %v145 = vadd.f32 %v114, %v144
    %v146 = vld [vmem:[#allocation6] sm:$0xff]
    %v147 = vld [vmem:[#allocation6 + $0x8] sm:$0xff]
    %v148 = vld [vmem:[#allocation6 + $0x10] sm:$0xff]
    %v149 = vld [vmem:[#allocation6 + $0x18] sm:$0xff]
    %v150 = vmul.f32 %v146, %v140
    %v151 = vmul.f32 %v147, %v141
    %v152 = vmul.f32 %v148, %v142
    %v153 = vmul.f32 %v149, %v143
    %154 = vst [vmem:[#allocation7] sm:$0xff] %v150
    %155 = vst [vmem:[#allocation7 + $0x8] sm:$0xff] %v151
    %156 = vst [vmem:[#allocation7 + $0x10] sm:$0xff] %v152
    %157 = vst [vmem:[#allocation7 + $0x18] sm:$0xff] %v153
    %v158 = vld [vmem:[%s2] sm:$0x1]
    %v159 = vmul.f32 %v158, %v145
    %160 = vst [vmem:[#allocation8] sm:$0x1] %v159
    // Predicated region
    $region22: #{tpu_custom_call.1} parent=1 // pred_check
      _
    $region23: #{tpu_custom_call.1} parent=1 // pred_check_branch
      %162 = sbr.rel (0) target = $region25
    $region24: #{tpu_custom_call.1} parent=1 // pred_region
      %s164 = ssub.s32 512, 512
      %165 = vsyncadd [#allocation4], %s164
      %s166 = sshll.u32 [#allocation7], 4
      %s167 = int_to_ptr.vmem [resolvable:$true] %s166
      %172 = dma.vmem_to_hbm [thread:$0]  %s167, 512, %s3, [#allocation4], 128, 128, 8
    $region25: #{tpu_custom_call.1} parent=1 // pred_fallthru
      _
    // Predicated region
    $region26: #{tpu_custom_call.1} parent=1 // pred_check
      _
    $region27: #{tpu_custom_call.1} parent=1 // pred_check_branch
      %174 = sbr.rel (0) target = $region29
    $region28: #{tpu_custom_call.1} parent=1 // pred_region
      %s176 = ssub.s32 16, 16
      %177 = vsyncadd [#allocation9], %s176
      %s179 = sshll.u32 [#allocation8], 4
      %s180 = int_to_ptr.vmem [resolvable:$true] %s179
      %182 = dma.vmem_to_hbm [thread:$0]  %s180, 16, %s4, [#allocation9]
    $region29: #{tpu_custom_call.1} parent=1 // pred_fallthru
      _
    // Predicated region
    $region30: #{tpu_custom_call.1} parent=1 // pred_check
      _
    $region31: #{tpu_custom_call.1} parent=1 // pred_check_branch
      %184 = sbr.rel (0) target = $region33
    $region32: #{tpu_custom_call.1} parent=1 // pred_region
      %185 = dma.done [#allocation4], 512
    $region33: #{tpu_custom_call.1} parent=1 // pred_fallthru
      _
    // Predicated region
    $region34: #{tpu_custom_call.1} parent=1 // pred_check
      _
    $region35: #{tpu_custom_call.1} parent=1 // pred_check_branch
      %187 = sbr.rel (0) target = $region37
    $region36: #{tpu_custom_call.1} parent=1 // pred_region
      %188 = dma.done [#allocation9], 16
    $region37: #{tpu_custom_call.1} parent=1 // pred_fallthru
      _
    %189 = vsyncpa [#allocation3], 1
    %190 = vsyncpa [#allocation4], 1
    %191 = vsyncpa [#allocation9], 1
    %192 = vsyncpa [#allocation5], 1

</llo_original>
